<compile_context>
chip_gen: v7x
topology: tpu7x:2x2x1
jax: 0.10.0
libtpu: 0.0.40
codegen_flags: <defaults>
</compile_context>

<pallas_src>
import functools

import jax
import jax.numpy as jnp
from jax.experimental import pallas as pl
from jax.experimental.pallas import tpu as pltpu


def _round_up(x, m):
    return (x + m - 1) // m * m


# --------------------------------------------------------------------------- #
# Kernel                                                                      #
# --------------------------------------------------------------------------- #
def _actor_kernel(hidden_layers, *refs):
    """One batch tile of the full ActorNetwork forward (weights VMEM-resident)."""
    it = iter(refs)
    state_ref = next(it)                      # (TB, state_dim)
    w0_ref = next(it)                         # (state_dim, H_p)
    b0_ref = next(it)                         # (1, H_p)           (f32)
    if hidden_layers > 0:
        wh_ref = next(it)                     # (L, H_p, H_p)
        bh_ref = next(it)                     # (L, 1, H_p)        (f32)
    wf_ref = next(it)                         # (H_p, H_p)
    bf_ref = next(it)                         # (1, H_p)           (f32)
    wc_ref = next(it)                         # (H_p, 2*A_p)  fused [Wm | Ws]
    bc_ref = next(it)                         # (1, 2*A_p)    fused [bm | bs]
    out_ref = next(it)                        # (TB, 2*A_p)   fused [mean | log_std]

    def dense(x, w, b):
        # Cast the activation to the weight dtype (no-op for f32; enables the
        # bf16 MXU-operand mode) and accumulate in f32.
        y = jnp.dot(x.astype(w.dtype), w, preferred_element_type=jnp.float32)
        return y + b

    # Input layer + ReLU.  Padded batch rows pick up bias/ReLU values; they are
    # sliced off outside the kernel (no in-kernel reductions over the batch).
    x = jnp.maximum(dense(state_ref[...].astype(jnp.float32), w0_ref[...], b0_ref[...]), 0.0)

    # Hidden layers (hidden_layers is a Python constant -> fully unrolled).
    for l in range(hidden_layers):
        x = jnp.maximum(dense(x, wh_ref[l], bh_ref[l]), 0.0)

    # Trunk final layer (final_activation='relu').
    x = jnp.maximum(dense(x, wf_ref[...], bf_ref[...]), 0.0)

    # Fused output heads: single lane-dense matmul + unmasked store.
    out_ref[...] = dense(x, wc_ref[...], bc_ref[...])


# --------------------------------------------------------------------------- #
# One-time parameter preparation (hoisted out of the hot path)                 #
# --------------------------------------------------------------------------- #
def prepare_params(params, hidden_layers, dtype=jnp.float32):
    """Pad, fuse and (optionally) cast the raw parameters once.

    Weights are padded so the hidden width is a multiple of 128 and each output
    head owns its own 128-lane slab (lane-aligned slices in the wrapper).
    Note: on v6e/v7x the MXU is 256 wide, so trunks with hidden_size a multiple
    of 256 fill it fully; we only pad to 128 to avoid doubling waste for small
    demo trunks.
    """
    (w0, b0, wh, bh, wf, bf, wm, bm, ws, bs) = params
    state_dim, H = w0.shape
    A = wm.shape[1]
    H_p = _round_up(H, 128)
    A_p = _round_up(A, 128)

    def padw(a, rows, cols):
        return jnp.pad(a, ((0, rows - a.shape[0]), (0, cols - a.shape[1]))).astype(dtype)

    def padb(a, cols):
        # Biases stay f32 (they are added to the f32 accumulation).
        return jnp.pad(a, ((0, 0), (0, cols - a.shape[1]))).astype(jnp.float32)

    # Input layer: keep the contraction dim (state_dim) unpadded so the per-call
    # state never needs a feature-dim pad (no inflated HBM copy of activations).
    w0_p = padw(w0, state_dim, H_p)
    b0_p = padb(b0, H_p)
    wf_p = padw(wf, H_p, H_p)
    bf_p = padb(bf, H_p)

    # Lane-aligned fused heads: pad each head to A_p *before* concatenating.
    wc_p = jnp.concatenate([padw(wm, H_p, A_p), padw(ws, H_p, A_p)], axis=1)
    bc_p = jnp.concatenate([padb(bm, A_p), padb(bs, A_p)], axis=1)

    prepared = [w0_p, b0_p]
    if hidden_layers > 0:
        wh_p = jnp.pad(
            wh[:hidden_layers],
            ((0, 0), (0, H_p - wh.shape[1]), (0, H_p - wh.shape[2]))).astype(dtype)
        bh_p = jnp.pad(
            bh[:hidden_layers],
            ((0, 0), (0, 0), (0, H_p - bh.shape[2]))).astype(jnp.float32)
        prepared += [wh_p, bh_p]
    prepared += [wf_p, bf_p, wc_p, bc_p]
    return tuple(jax.device_put(p) for p in prepared)


# --------------------------------------------------------------------------- #
# Jitted forward wrapper                                                      #
# --------------------------------------------------------------------------- #
def _resident_spec(arr):
    """Full-array block with a constant index_map -> stays resident in VMEM."""
    ndim = arr.ndim
    return pl.BlockSpec(arr.shape, lambda i, _n=ndim: (0,) * _n)


@functools.partial(jax.jit, static_argnames=("hidden_layers", "action_dim"))
def actor_forward(state, prepared, *, hidden_layers, action_dim):
    """ActorNetwork forward: returns (mean, log_std), each (B, action_dim)."""
    B, state_dim = state.shape
    w0_p = prepared[0]
    wc_p = prepared[-2]
    H_p = w0_p.shape[1]
    A2_p = wc_p.shape[1]
    A_p = A2_p // 2

    # Batch tiling: grid over the batch so large batches pipeline the state/out
    # DMA behind the matmuls; tiny batches get a single grid step.
    TB = min(512, _round_up(B, 8))
    B_p = _round_up(B, TB)

    state = state.astype(jnp.float32)
    if B_p != B:  # static-shape decision; usually a no-op
        state = jnp.pad(state, ((0, B_p - B), (0, 0)))

    inputs = (state,) + tuple(prepared)
    in_specs = [pl.BlockSpec((TB, state_dim), lambda i: (i, 0))]
    in_specs += [_resident_spec(p) for p in prepared]
    out_spec = pl.BlockSpec((TB, A2_p), lambda i: (i, 0))

    # Explicit VMEM budget: resident weights (x2 for buffering slack), the
    # double-buffered state/out tiles, intermediate activations, plus headroom.
    weight_bytes = sum(p.size * p.dtype.itemsize for p in prepared)
    io_bytes = TB * (state_dim + A2_p) * 4
    act_bytes = TB * H_p * 4
    vmem_limit = int(min(
        max(2 * weight_bytes + 2 * io_bytes + 4 * act_bytes + (8 << 20), 32 << 20),
        100 << 20))

    out = pl.pallas_call(
        functools.partial(_actor_kernel, hidden_layers),
        grid_spec=pltpu.PrefetchScalarGridSpec(
            num_scalar_prefetch=0,
            grid=(B_p // TB,),
            in_specs=in_specs,
            out_specs=out_spec,
        ),
        out_shape=jax.ShapeDtypeStruct((B_p, A2_p), jnp.float32),
        compiler_params=pltpu.CompilerParams(
            dimension_semantics=("parallel",),   # shards batch tiles across TCs on v7x
            vmem_limit_bytes=vmem_limit,
        ),
    )(*inputs)

    # Both slices start on a 128-lane boundary (0 and A_p) -> aligned copies.
    mean = out[:B, :action_dim]
    log_std = out[:B, A_p:A_p + action_dim]
    return mean, log_std


# --------------------------------------------------------------------------- #
# Parameter init + pure-JAX reference                                         #
# --------------------------------------------------------------------------- #
def init_params(key, state_dim, action_dim, hidden_size, hidden_layers):
    """Deterministic synthetic parameters (shapes match the PyTorch module)."""
    keys = jax.random.split(key, 10)
    scale = 0.1

    def lin(kw, kb, din, dout):
        w = scale * jax.random.normal(kw, (din, dout), jnp.float32)
        b = scale * jax.random.normal(kb, (1, dout), jnp.float32)
        return w, b

    w0, b0 = lin(keys[0], keys[1], state_dim, hidden_size)
    wh = scale * jax.random.normal(
        keys[2], (max(hidden_layers, 1), hidden_size, hidden_size), jnp.float32)
    bh = scale * jax.random.normal(
        keys[3], (max(hidden_layers, 1), 1, hidden_size), jnp.float32)
    wf, bf = lin(keys[4], keys[5], hidden_size, hidden_size)   # trunk output layer
    wm, bm = lin(keys[6], keys[7], hidden_size, action_dim)    # output_mean
    ws, bs = lin(keys[8], keys[9], hidden_size, action_dim)    # output_log_std
    return (w0, b0, wh, bh, wf, bf, wm, bm, ws, bs)


def actor_forward_ref(state, params, hidden_layers):
    """Pure-JAX reference (same default matmul precision as the kernel)."""
    (w0, b0, wh, bh, wf, bf, wm, bm, ws, bs) = params
    x = jnp.maximum(state @ w0 + b0, 0.0)
    for l in range(hidden_layers):
        x = jnp.maximum(x @ wh[l] + bh[l], 0.0)
    x = jnp.maximum(x @ wf + bf, 0.0)
    return x @ wm + bm, x @ ws + bs


# --------------------------------------------------------------------------- #
# Demo / self-check                                                           #
# --------------------------------------------------------------------------- #
if __name__ == "__main__":
    B = 8
    STATE_DIM = 16
    ACTION_DIM = 4
    HIDDEN_SIZE = 32
    HIDDEN_LAYERS = 2

    key = jax.random.PRNGKey(0)
    k_state, k_params = jax.random.split(key)

    state = jax.random.normal(k_state, (B, STATE_DIM), jnp.float32)
    params = init_params(k_params, STATE_DIM, ACTION_DIM, HIDDEN_SIZE, HIDDEN_LAYERS)

    # One-time parameter prep (padding + head fusion) hoisted out of the hot path.
    prepared = prepare_params(params, HIDDEN_LAYERS, dtype=jnp.float32)

    mean, log_std = actor_forward(state, prepared,
                                  hidden_layers=HIDDEN_LAYERS, action_dim=ACTION_DIM)
    mean, log_std = jax.block_until_ready((mean, log_std))

    mean_ref, log_std_ref = actor_forward_ref(state, params, HIDDEN_LAYERS)
    assert mean.shape == (B, ACTION_DIM) and log_std.shape == (B, ACTION_DIM)
    assert jnp.allclose(mean, mean_ref, atol=1e-5, rtol=1e-5)
    assert jnp.allclose(log_std, log_std_ref, atol=1e-5, rtol=1e-5)

    # hidden_layers == 0 path (stacked hidden weights not passed at all).
    prepared0 = prepare_params(params, 0, dtype=jnp.float32)
    mean0, log_std0 = actor_forward(state, prepared0,
                                    hidden_layers=0, action_dim=ACTION_DIM)
    mean0, log_std0 = jax.block_until_ready((mean0, log_std0))
    mean0_ref, log_std0_ref = actor_forward_ref(state, params, 0)
    assert jnp.allclose(mean0, mean0_ref, atol=1e-5, rtol=1e-5)
    assert jnp.allclose(log_std0, log_std0_ref, atol=1e-5, rtol=1e-5)

    # bf16 MXU-operand path (f32 accumulation): looser tolerance.
    prepared_bf16 = prepare_params(params, HIDDEN_LAYERS, dtype=jnp.bfloat16)
    mean_b, log_std_b = actor_forward(state, prepared_bf16,
                                      hidden_layers=HIDDEN_LAYERS, action_dim=ACTION_DIM)
    mean_b, log_std_b = jax.block_until_ready((mean_b, log_std_b))
    assert jnp.allclose(mean_b, mean_ref, atol=1e-1, rtol=1e-1)
    assert jnp.allclose(log_std_b, log_std_ref, atol=1e-1, rtol=1e-1)

    print("KERNEL_OK")
</pallas_src>

<mosaic_0001>
module attributes {stable_mosaic.version = 11 : i64} {
  func.func @_actor_kernel(%arg0: i32, %arg1: memref<8x16xf32, #tpu.memory_space<vmem>>, %arg2: memref<16x128xf32, #tpu.memory_space<vmem>>, %arg3: memref<1x128xf32, #tpu.memory_space<vmem>>, %arg4: memref<2x128x128xf32, #tpu.memory_space<vmem>>, %arg5: memref<2x1x128xf32, #tpu.memory_space<vmem>>, %arg6: memref<128x128xf32, #tpu.memory_space<vmem>>, %arg7: memref<1x128xf32, #tpu.memory_space<vmem>>, %arg8: memref<128x256xf32, #tpu.memory_space<vmem>>, %arg9: memref<1x256xf32, #tpu.memory_space<vmem>>, %arg10: memref<8x256xf32, #tpu.memory_space<vmem>>) attributes {dimension_semantics = [#tpu.dimension_semantics<parallel>], iteration_bounds = array<i64: 1>, scalar_prefetch = 0 : i64, scratch_operands = 0 : i64, tpu.core_type = #tpu.core_type<tc>, window_params = [{transform_indices = @transform_0, window_bounds = array<i64: 8, 16>}, {pipeline_mode = #tpu.pipeline_mode<synchronous>, transform_indices = @transform_1, window_bounds = array<i64: 16, 128>}, {pipeline_mode = #tpu.pipeline_mode<synchronous>, transform_indices = @transform_2, window_bounds = array<i64: 1, 128>}, {pipeline_mode = #tpu.pipeline_mode<synchronous>, transform_indices = @transform_3, window_bounds = array<i64: 2, 128, 128>}, {pipeline_mode = #tpu.pipeline_mode<synchronous>, transform_indices = @transform_4, window_bounds = array<i64: 2, 1, 128>}, {pipeline_mode = #tpu.pipeline_mode<synchronous>, transform_indices = @transform_5, window_bounds = array<i64: 128, 128>}, {pipeline_mode = #tpu.pipeline_mode<synchronous>, transform_indices = @transform_6, window_bounds = array<i64: 1, 128>}, {pipeline_mode = #tpu.pipeline_mode<synchronous>, transform_indices = @transform_7, window_bounds = array<i64: 128, 256>}, {pipeline_mode = #tpu.pipeline_mode<synchronous>, transform_indices = @transform_8, window_bounds = array<i64: 1, 256>}, {transform_indices = @transform_9, window_bounds = array<i64: 8, 256>}]} {
    %c0 = arith.constant 0 : index
    %c0_0 = arith.constant 0 : index
    %0 = vector.load %arg1[%c0, %c0_0] : memref<8x16xf32, #tpu.memory_space<vmem>>, vector<8x16xf32>
    %c0_1 = arith.constant 0 : index
    %c0_2 = arith.constant 0 : index
    %1 = vector.load %arg2[%c0_1, %c0_2] : memref<16x128xf32, #tpu.memory_space<vmem>>, vector<16x128xf32>
    %c0_3 = arith.constant 0 : index
    %c0_4 = arith.constant 0 : index
    %2 = vector.load %arg3[%c0_3, %c0_4] : memref<1x128xf32, #tpu.memory_space<vmem>>, vector<1x128xf32>
    %cst = arith.constant dense<0.000000e+00> : vector<8x128xf32>
    %3 = tpu.matmul %0, %1, %cst {dimension_numbers = #tpu.dot_dimension_numbers<[1], [0], [0], [1], [0, 0, 1, 1], [], []>} : vector<8x16xf32>, vector<16x128xf32>, vector<8x128xf32> -> vector<8x128xf32>
    %4 = vector.broadcast %2 : vector<1x128xf32> to vector<8x128xf32>
    %5 = arith.addf %3, %4 : vector<8x128xf32>
    %cst_5 = arith.constant 0.000000e+00 : f32
    %6 = vector.broadcast %cst_5 : f32 to vector<8x128xf32>
    %7 = arith.maximumf %5, %6 : vector<8x128xf32>
    %c0_6 = arith.constant 0 : index
    %c0_7 = arith.constant 0 : index
    %c0_8 = arith.constant 0 : index
    %8 = vector.load %arg4[%c0_6, %c0_7, %c0_8] : memref<2x128x128xf32, #tpu.memory_space<vmem>>, vector<1x128x128xf32>
    %9 = vector.shape_cast %8 : vector<1x128x128xf32> to vector<128x128xf32>
    %c0_9 = arith.constant 0 : index
    %c0_10 = arith.constant 0 : index
    %c0_11 = arith.constant 0 : index
    %10 = vector.load %arg5[%c0_9, %c0_10, %c0_11] : memref<2x1x128xf32, #tpu.memory_space<vmem>>, vector<1x1x128xf32>
    %11 = vector.shape_cast %10 : vector<1x1x128xf32> to vector<1x128xf32>
    %cst_12 = arith.constant dense<0.000000e+00> : vector<8x128xf32>
    %12 = tpu.matmul %7, %9, %cst_12 {dimension_numbers = #tpu.dot_dimension_numbers<[1], [0], [0], [1], [0, 0, 1, 1], [], []>} : vector<8x128xf32>, vector<128x128xf32>, vector<8x128xf32> -> vector<8x128xf32>
    %13 = vector.broadcast %11 : vector<1x128xf32> to vector<8x128xf32>
    %14 = arith.addf %12, %13 : vector<8x128xf32>
    %cst_13 = arith.constant 0.000000e+00 : f32
    %15 = vector.broadcast %cst_13 : f32 to vector<8x128xf32>
    %16 = arith.maximumf %14, %15 : vector<8x128xf32>
    %c1 = arith.constant 1 : index
    %c0_14 = arith.constant 0 : index
    %c0_15 = arith.constant 0 : index
    %17 = vector.load %arg4[%c1, %c0_14, %c0_15] : memref<2x128x128xf32, #tpu.memory_space<vmem>>, vector<1x128x128xf32>
    %18 = vector.shape_cast %17 : vector<1x128x128xf32> to vector<128x128xf32>
    %c1_16 = arith.constant 1 : index
    %c0_17 = arith.constant 0 : index
    %c0_18 = arith.constant 0 : index
    %19 = vector.load %arg5[%c1_16, %c0_17, %c0_18] : memref<2x1x128xf32, #tpu.memory_space<vmem>>, vector<1x1x128xf32>
    %20 = vector.shape_cast %19 : vector<1x1x128xf32> to vector<1x128xf32>
    %cst_19 = arith.constant dense<0.000000e+00> : vector<8x128xf32>
    %21 = tpu.matmul %16, %18, %cst_19 {dimension_numbers = #tpu.dot_dimension_numbers<[1], [0], [0], [1], [0, 0, 1, 1], [], []>} : vector<8x128xf32>, vector<128x128xf32>, vector<8x128xf32> -> vector<8x128xf32>
    %22 = vector.broadcast %20 : vector<1x128xf32> to vector<8x128xf32>
    %23 = arith.addf %21, %22 : vector<8x128xf32>
    %cst_20 = arith.constant 0.000000e+00 : f32
    %24 = vector.broadcast %cst_20 : f32 to vector<8x128xf32>
    %25 = arith.maximumf %23, %24 : vector<8x128xf32>
    %c0_21 = arith.constant 0 : index
    %c0_22 = arith.constant 0 : index
    %26 = vector.load %arg6[%c0_21, %c0_22] : memref<128x128xf32, #tpu.memory_space<vmem>>, vector<128x128xf32>
    %c0_23 = arith.constant 0 : index
    %c0_24 = arith.constant 0 : index
    %27 = vector.load %arg7[%c0_23, %c0_24] : memref<1x128xf32, #tpu.memory_space<vmem>>, vector<1x128xf32>
    %cst_25 = arith.constant dense<0.000000e+00> : vector<8x128xf32>
    %28 = tpu.matmul %25, %26, %cst_25 {dimension_numbers = #tpu.dot_dimension_numbers<[1], [0], [0], [1], [0, 0, 1, 1], [], []>} : vector<8x128xf32>, vector<128x128xf32>, vector<8x128xf32> -> vector<8x128xf32>
    %29 = vector.broadcast %27 : vector<1x128xf32> to vector<8x128xf32>
    %30 = arith.addf %28, %29 : vector<8x128xf32>
    %cst_26 = arith.constant 0.000000e+00 : f32
    %31 = vector.broadcast %cst_26 : f32 to vector<8x128xf32>
    %32 = arith.maximumf %30, %31 : vector<8x128xf32>
    %c0_27 = arith.constant 0 : index
    %c0_28 = arith.constant 0 : index
    %33 = vector.load %arg8[%c0_27, %c0_28] : memref<128x256xf32, #tpu.memory_space<vmem>>, vector<128x256xf32>
    %c0_29 = arith.constant 0 : index
    %c0_30 = arith.constant 0 : index
    %34 = vector.load %arg9[%c0_29, %c0_30] : memref<1x256xf32, #tpu.memory_space<vmem>>, vector<1x256xf32>
    %cst_31 = arith.constant dense<0.000000e+00> : vector<8x256xf32>
    %35 = tpu.matmul %32, %33, %cst_31 {dimension_numbers = #tpu.dot_dimension_numbers<[1], [0], [0], [1], [0, 0, 1, 1], [], []>} : vector<8x128xf32>, vector<128x256xf32>, vector<8x256xf32> -> vector<8x256xf32>
    %36 = vector.broadcast %34 : vector<1x256xf32> to vector<8x256xf32>
    %37 = arith.addf %35, %36 : vector<8x256xf32>
    %c0_32 = arith.constant 0 : index
    %c0_33 = arith.constant 0 : index
    %38 = vector.load %arg10[%c0_32, %c0_33] : memref<8x256xf32, #tpu.memory_space<vmem>>, vector<8x256xf32>
    tpu.vector_store %arg10[%c0_32, %c0_33], %37 {strides = array<i32>} : memref<8x256xf32, #tpu.memory_space<vmem>>, vector<8x256xf32>,
    return
  }
  func.func @transform_0(%arg0: i32) -> (i32, i32) {
    %c0_i32 = arith.constant 0 : i32
    %c0_i32_0 = arith.constant 0 : i32
    return %arg0, %c0_i32 : i32, i32
  }
  func.func @transform_1(%arg0: i32) -> (i32, i32) {
    %c0_i32 = arith.constant 0 : i32
    %c0_i32_0 = arith.constant 0 : i32
    %c0_i32_1 = arith.constant 0 : i32
    return %c0_i32, %c0_i32_0 : i32, i32
  }
  func.func @transform_2(%arg0: i32) -> (i32, i32) {
    %c0_i32 = arith.constant 0 : i32
    %c0_i32_0 = arith.constant 0 : i32
    %c0_i32_1 = arith.constant 0 : i32
    return %c0_i32, %c0_i32_0 : i32, i32
  }
  func.func @transform_3(%arg0: i32) -> (i32, i32, i32) {
    %c0_i32 = arith.constant 0 : i32
    %c0_i32_0 = arith.constant 0 : i32
    %c0_i32_1 = arith.constant 0 : i32
    %c0_i32_2 = arith.constant 0 : i32
    return %c0_i32, %c0_i32_0, %c0_i32_1 : i32, i32, i32
  }
  func.func @transform_4(%arg0: i32) -> (i32, i32, i32) {
    %c0_i32 = arith.constant 0 : i32
    %c0_i32_0 = arith.constant 0 : i32
    %c0_i32_1 = arith.constant 0 : i32
    %c0_i32_2 = arith.constant 0 : i32
    return %c0_i32, %c0_i32_0, %c0_i32_1 : i32, i32, i32
  }
  func.func @transform_5(%arg0: i32) -> (i32, i32) {
    %c0_i32 = arith.constant 0 : i32
    %c0_i32_0 = arith.constant 0 : i32
    %c0_i32_1 = arith.constant 0 : i32
    return %c0_i32, %c0_i32_0 : i32, i32
  }
  func.func @transform_6(%arg0: i32) -> (i32, i32) {
    %c0_i32 = arith.constant 0 : i32
    %c0_i32_0 = arith.constant 0 : i32
    %c0_i32_1 = arith.constant 0 : i32
    return %c0_i32, %c0_i32_0 : i32, i32
  }
  func.func @transform_7(%arg0: i32) -> (i32, i32) {
    %c0_i32 = arith.constant 0 : i32
    %c0_i32_0 = arith.constant 0 : i32
    %c0_i32_1 = arith.constant 0 : i32
    return %c0_i32, %c0_i32_0 : i32, i32
  }
  func.func @transform_8(%arg0: i32) -> (i32, i32) {
    %c0_i32 = arith.constant 0 : i32
    %c0_i32_0 = arith.constant 0 : i32
    %c0_i32_1 = arith.constant 0 : i32
    return %c0_i32, %c0_i32_0 : i32, i32
  }
  func.func @transform_9(%arg0: i32) -> (i32, i32) {
    %c0_i32 = arith.constant 0 : i32
    %c0_i32_0 = arith.constant 0 : i32
    return %arg0, %c0_i32 : i32, i32
  }
}

</mosaic_0001>

<llo_original>
// kernel: actor_forward.1
$region0: #{actor_forward.1}
  #allocation0 [shape = 'u32[]', space=smem, size = 0x4, offset = 0x4, fixed_abs, tag = 'smem constant byte address 0x4 - core index']
  #allocation1 [shape = 'u32[144,128]{1,0:T(1,128)}', space=vmem, size = 0x12000, scoped, tag = 'internal scratch']
  %s0 = inlined_call_operand.hbm [shape: f32[8,16], index: 0, kind: input, shape index: {}]
  %s1 = inlined_call_operand.hbm [shape: f32[16,128], index: 1, kind: input, shape index: {}]
  %s2 = inlined_call_operand.vmem [shape: f32[1,128], index: 2, kind: input, shape index: {}]
  %s3 = inlined_call_operand.hbm [shape: f32[2,128,128], index: 3, kind: input, shape index: {}]
  %s4 = inlined_call_operand.vmem [shape: f32[2,1,128], index: 4, kind: input, shape index: {}]
  %s5 = inlined_call_operand.hbm [shape: f32[128,128], index: 5, kind: input, shape index: {}]
  %s6 = inlined_call_operand.vmem [shape: f32[1,128], index: 6, kind: input, shape index: {}]
  %s7 = inlined_call_operand.hbm [shape: f32[128,256], index: 7, kind: input, shape index: {}]
  %s8 = inlined_call_operand.vmem [shape: f32[1,256], index: 8, kind: input, shape index: {}]
  %s9 = inlined_call_operand.vmem [shape: f32[8,256], index: 9, kind: output, shape index: {}]
  %s10 = sld [smem:[#allocation0]]
  $region66: #{actor_forward.1} parent=0
    _
  %s12 = ssub.s32 1, %s10
  %s13 = scalar_select 0, %s12, %s10
  $region1: #{actor_forward.1} parent=0
    #allocation2 [shape = 'u8[4096]{0}', space=vmem, size = 0x1000, scoped, tag = 'input window, operand 0, single buffered']
    #allocation3 [shape = 's32[1]{0}', space=sflag, size = 0x4, scoped, tag = 'scoped memory for actor_forward.1']
    #allocation4 [shape = 'u8[8192]{0}', space=vmem, size = 0x2000, scoped, tag = 'input window, operand 1, single buffered']
    #allocation5 [shape = 's32[1]{0}', space=sflag, size = 0x4, scoped, tag = 'scoped memory for actor_forward.1']
    #allocation6 [shape = 'u8[131072]{0}', space=vmem, size = 0x20000, scoped, tag = 'input window, operand 3, single buffered']
    #allocation7 [shape = 'u8[65536]{0}', space=vmem, size = 0x10000, scoped, tag = 'input window, operand 5, single buffered']
    #allocation8 [shape = 's32[1]{0}', space=sflag, size = 0x4, scoped, tag = 'scoped memory for actor_forward.1']
    #allocation9 [shape = 'u8[131072]{0}', space=vmem, size = 0x20000, scoped, tag = 'input window, operand 7, single buffered']
    %14 = vsyncpa [#allocation3], 0
    %15 = vsyncpa [#allocation5], 0
    %16 = vsyncpa [#allocation8], 0
    // Predicated region
    $region2: #{actor_forward.1} parent=1 // pred_check
      _
    $region3: #{actor_forward.1} parent=1 // pred_check_branch
      %18 = sbr.rel (0) target = $region5
    $region4: #{actor_forward.1} parent=1 // pred_region
      %s20 = ssub.s32 128, 128
      %21 = vsyncadd [#allocation3], %s20
      %s23 = sshll.u32 [#allocation2], 4
      %s24 = int_to_ptr.vmem [resolvable:$true] %s23
      %26 = dma.hbm_to_vmem [thread:$0]  %s0, 128, %s24, [#allocation3]
    $region5: #{actor_forward.1} parent=1 // pred_fallthru
      _
    // Predicated region
    $region6: #{actor_forward.1} parent=1 // pred_check
      _
    $region7: #{actor_forward.1} parent=1 // pred_check_branch
      %28 = sbr.rel (0) target = $region9
    $region8: #{actor_forward.1} parent=1 // pred_region
      %s30 = ssub.s32 256, 256
      %31 = vsyncadd [#allocation5], %s30
      %s32 = sshll.u32 [#allocation4], 4
      %s33 = int_to_ptr.vmem [resolvable:$true] %s32
      %38 = dma.hbm_to_vmem [thread:$0]  %s1, 256, %s33, [#allocation5], 128, 128, 8
    $region9: #{actor_forward.1} parent=1 // pred_fallthru
      _
    // Predicated region
    $region10: #{actor_forward.1} parent=1 // pred_check
      _
    $region11: #{actor_forward.1} parent=1 // pred_check_branch
      %40 = sbr.rel (0) target = $region13
    $region12: #{actor_forward.1} parent=1 // pred_region
      _
    $region13: #{actor_forward.1} parent=1 // pred_fallthru
      _
    // Predicated region
    $region14: #{actor_forward.1} parent=1 // pred_check
      _
    $region15: #{actor_forward.1} parent=1 // pred_check_branch
      %42 = sbr.rel (0) target = $region17
    $region16: #{actor_forward.1} parent=1 // pred_region
      %s44 = ssub.s32 4096, 4096
      %45 = vsyncadd [#allocation5], %s44
      %s46 = sshll.u32 [#allocation6], 4
      %s47 = int_to_ptr.vmem [resolvable:$true] %s46
      %52 = dma.hbm_to_vmem [thread:$0]  %s3, 4096, %s47, [#allocation5], 128, 128, 8
    $region17: #{actor_forward.1} parent=1 // pred_fallthru
      _
    // Predicated region
    $region18: #{actor_forward.1} parent=1 // pred_check
      _
    $region19: #{actor_forward.1} parent=1 // pred_check_branch
      %54 = sbr.rel (0) target = $region21
    $region20: #{actor_forward.1} parent=1 // pred_region
      _
    $region21: #{actor_forward.1} parent=1 // pred_fallthru
      _
    // Predicated region
    $region22: #{actor_forward.1} parent=1 // pred_check
      _
    $region23: #{actor_forward.1} parent=1 // pred_check_branch
      %56 = sbr.rel (0) target = $region25
    $region24: #{actor_forward.1} parent=1 // pred_region
      %s58 = ssub.s32 2048, 2048
      %59 = vsyncadd [#allocation8], %s58
      %s60 = sshll.u32 [#allocation7], 4
      %s61 = int_to_ptr.vmem [resolvable:$true] %s60
      %66 = dma.hbm_to_vmem [thread:$0]  %s5, 2048, %s61, [#allocation8], 128, 128, 8
    $region25: #{actor_forward.1} parent=1 // pred_fallthru
      _
    // Predicated region
    $region26: #{actor_forward.1} parent=1 // pred_check
      _
    $region27: #{actor_forward.1} parent=1 // pred_check_branch
      %68 = sbr.rel (0) target = $region29
    $region28: #{actor_forward.1} parent=1 // pred_region
      _
    $region29: #{actor_forward.1} parent=1 // pred_fallthru
      _
    // Predicated region
    $region30: #{actor_forward.1} parent=1 // pred_check
      _
    $region31: #{actor_forward.1} parent=1 // pred_check_branch
      %70 = sbr.rel (0) target = $region33
    $region32: #{actor_forward.1} parent=1 // pred_region
      %s72 = ssub.s32 4096, 4096
      %73 = vsyncadd [#allocation8], %s72
      %s74 = sshll.u32 [#allocation9], 4
      %s75 = int_to_ptr.vmem [resolvable:$true] %s74
      %80 = dma.hbm_to_vmem [thread:$0]  %s7, 4096, %s75, [#allocation8], 256, 256, 16
    $region33: #{actor_forward.1} parent=1 // pred_fallthru
      _
    // Predicated region
    $region34: #{actor_forward.1} parent=1 // pred_check
      _
    $region35: #{actor_forward.1} parent=1 // pred_check_branch
      %82 = sbr.rel (0) target = $region37
    $region36: #{actor_forward.1} parent=1 // pred_region
      _
    $region37: #{actor_forward.1} parent=1 // pred_fallthru
      _
    // Predicated region
    $region38: #{actor_forward.1} parent=1 // pred_check
      _
    $region39: #{actor_forward.1} parent=1 // pred_check_branch
      %84 = sbr.rel (0) target = $region41
    $region40: #{actor_forward.1} parent=1 // pred_region
      %85 = dma.done [#allocation3], 128
    $region41: #{actor_forward.1} parent=1 // pred_fallthru
      _
    // Predicated region
    $region42: #{actor_forward.1} parent=1 // pred_check
      _
    $region43: #{actor_forward.1} parent=1 // pred_check_branch
      %87 = sbr.rel (0) target = $region45
    $region44: #{actor_forward.1} parent=1 // pred_region
      %88 = dma.done [#allocation5], 256
    $region45: #{actor_forward.1} parent=1 // pred_fallthru
      _
    // Predicated region
    $region46: #{actor_forward.1} parent=1 // pred_check
      _
    $region47: #{actor_forward.1} parent=1 // pred_check_branch
      %90 = sbr.rel (0) target = $region49
    $region48: #{actor_forward.1} parent=1 // pred_region
      %91 = dma.done [#allocation5], 4096
    $region49: #{actor_forward.1} parent=1 // pred_fallthru
      _
    // Predicated region
    $region50: #{actor_forward.1} parent=1 // pred_check
      _
    $region51: #{actor_forward.1} parent=1 // pred_check_branch
      %93 = sbr.rel (0) target = $region53
    $region52: #{actor_forward.1} parent=1 // pred_region
      %94 = dma.done [#allocation8], 2048
    $region53: #{actor_forward.1} parent=1 // pred_fallthru
      _
    // Predicated region
    $region54: #{actor_forward.1} parent=1 // pred_check
      _
    $region55: #{actor_forward.1} parent=1 // pred_check_branch
      %96 = sbr.rel (0) target = $region57
    $region56: #{actor_forward.1} parent=1 // pred_region
      %97 = dma.done [#allocation8], 4096
    $region57: #{actor_forward.1} parent=1 // pred_fallthru
      _
    %v98 = vld [vmem:[#allocation2] sm:$0xff]
    %v99 = vld [vmem:[#allocation4] sm:$0xff]
    %v100 = vld [vmem:[#allocation4 + $0x8] sm:$0xff]
    %v101 = vld [vmem:[%s2] sm:$0x1]
    %v103 = vlaneseq
    %v104 = vshrl.u32 %v103, 7
    %v105 = vsub.s32 0, %v104
    %v106 = vrot.slane %v101, %v105
    %vm108 = vcmask 130048
    %v110 = vsel %vm108, %v98, 0
    %112 = vmatprep.subr.mxu0 0.0
    %113 = vmatpush1.msra.mxu0 %v99
    %114 = vmatprep.subr.mxu0 0.0
    %115 = vmatpush1.msra.mxu0 %v100
    %116 = vmatprep.subr.mxu0 0.0
    %117 = vmatpush1.msra.mxu0 0.0
    %118 = vmatprep.subr.mxu0 0.0
    %119 = vmatpush1.msra.mxu0 0.0
    %120 = vmatprep.subr.mxu0 0.0
    %121 = vmatpush1.msra.mxu0 0.0
    %122 = vmatprep.subr.mxu0 0.0
    %123 = vmatpush1.msra.mxu0 0.0
    %124 = vmatprep.subr.mxu0 0.0
    %125 = vmatpush1.msra.mxu0 0.0
    %126 = vmatprep.subr.mxu0 0.0
    %127 = vmatpush1.msra.mxu0 0.0
    %128 = vmatprep.subr.mxu0 0.0
    %129 = vmatpush1.msra.mxu0 0.0
    %130 = vmatprep.subr.mxu0 0.0
    %131 = vmatpush1.msra.mxu0 0.0
    %132 = vmatprep.subr.mxu0 0.0
    %133 = vmatpush1.msra.mxu0 0.0
    %134 = vmatprep.subr.mxu0 0.0
    %135 = vmatpush1.msra.mxu0 0.0
    %136 = vmatprep.subr.mxu0 0.0
    %137 = vmatpush1.msra.mxu0 0.0
    %138 = vmatprep.subr.mxu0 0.0
    %139 = vmatpush1.msra.mxu0 0.0
    %140 = vmatprep.subr.mxu0 0.0
    %141 = vmatpush1.msra.mxu0 0.0
    %142 = vmatprep.subr.mxu0 0.0
    %143 = vmatpush1.msra.mxu0 0.0
    %144 = vmatprep.subr.mxu0 0.0
    %145 = vmatpush1.msra.mxu0 0.0
    %146 = vmatprep.subr.mxu0 0.0
    %147 = vmatpush1.msra.mxu0 0.0
    %148 = vmatprep.subr.mxu0 0.0
    %149 = vmatpush1.msra.mxu0 0.0
    %150 = vmatprep.subr.mxu0 0.0
    %151 = vmatpush1.msra.mxu0 0.0
    %152 = vmatprep.subr.mxu0 0.0
    %153 = vmatpush1.msra.mxu0 0.0
    %154 = vmatprep.subr.mxu0 0.0
    %155 = vmatpush1.msra.mxu0 0.0
    %156 = vmatprep.subr.mxu0 0.0
    %157 = vmatpush1.msra.mxu0 0.0
    %158 = vmatprep.subr.mxu0 0.0
    %159 = vmatpush1.msra.mxu0 0.0
    %160 = vmatprep.subr.mxu0 0.0
    %161 = vmatpush1.msra.mxu0 0.0
    %162 = vmatprep.subr.mxu0 0.0
    %163 = vmatpush1.msra.mxu0 0.0
    %164 = vmatprep.subr.mxu0 0.0
    %165 = vmatpush1.msra.mxu0 0.0
    %166 = vmatprep.subr.mxu0 0.0
    %167 = vmatpush1.msra.mxu0 0.0
    %168 = vmatprep.subr.mxu0 0.0
    %169 = vmatpush1.msra.mxu0 0.0
    %170 = vmatprep.subr.mxu0 0.0
    %171 = vmatpush1.msra.mxu0 0.0
    %172 = vmatprep.subr.mxu0 0.0
    %173 = vmatpush1.msra.mxu0 0.0
    %174 = vmatprep.subr.mxu0 0.0
    %175 = vmatpush1.msra.mxu0 0.0
    %176 = vmatprep.mubr.f32.mxu0 0.0
    %177 = vmatmul.mubr.f32.gmra.mrb[0].mxu0 %v110
    %v178 = vpop.f32.mrb[0].mxu0
    %v179 = vadd.f32 %v106, %v178
    %v180 = vpop.f32.mrb[0].mxu0
    %181 = vdwg.mxu0
    %v182 = vmax.f32 %v179, 0.0
    %v183 = vld [vmem:[#allocation6] sm:$0xff]
    %v184 = vld [vmem:[#allocation6 + $0x8] sm:$0xff]
    %v185 = vld [vmem:[#allocation6 + $0x10] sm:$0xff]
    %v186 = vld [vmem:[#allocation6 + $0x18] sm:$0xff]
    %v187 = vld [vmem:[#allocation6 + $0x20] sm:$0xff]
    %v188 = vld [vmem:[#allocation6 + $0x28] sm:$0xff]
    %v189 = vld [vmem:[#allocation6 + $0x30] sm:$0xff]
    %v190 = vld [vmem:[#allocation6 + $0x38] sm:$0xff]
    %v191 = vld [vmem:[#allocation6 + $0x40] sm:$0xff]
    %v192 = vld [vmem:[#allocation6 + $0x48] sm:$0xff]
    %v193 = vld [vmem:[#allocation6 + $0x50] sm:$0xff]
    %v194 = vld [vmem:[#allocation6 + $0x58] sm:$0xff]
    %v195 = vld [vmem:[#allocation6 + $0x60] sm:$0xff]
    %v196 = vld [vmem:[#allocation6 + $0x68] sm:$0xff]
    %v197 = vld [vmem:[#allocation6 + $0x70] sm:$0xff]
    %v198 = vld [vmem:[#allocation6 + $0x78] sm:$0xff]
    %v199 = vld [vmem:[%s4] sm:$0x1]
    %v201 = vlaneseq
    %v202 = vshrl.u32 %v201, 7
    %v203 = vsub.s32 0, %v202
    %v204 = vrot.slane %v199, %v203
    %206 = vmatprep.subr.mxu0 0.0
    %207 = vmatpush1.msra.mxu0 %v183
    %208 = vmatprep.subr.mxu0 0.0
    %209 = vmatpush1.msra.mxu0 %v184
    %210 = vmatprep.subr.mxu0 0.0
    %211 = vmatpush1.msra.mxu0 %v185
    %212 = vmatprep.subr.mxu0 0.0
    %213 = vmatpush1.msra.mxu0 %v186
    %214 = vmatprep.subr.mxu0 0.0
    %215 = vmatpush1.msra.mxu0 %v187
    %216 = vmatprep.subr.mxu0 0.0
    %217 = vmatpush1.msra.mxu0 %v188
    %218 = vmatprep.subr.mxu0 0.0
    %219 = vmatpush1.msra.mxu0 %v189
    %220 = vmatprep.subr.mxu0 0.0
    %221 = vmatpush1.msra.mxu0 %v190
    %222 = vmatprep.subr.mxu0 0.0
    %223 = vmatpush1.msra.mxu0 %v191
    %224 = vmatprep.subr.mxu0 0.0
    %225 = vmatpush1.msra.mxu0 %v192
    %226 = vmatprep.subr.mxu0 0.0
    %227 = vmatpush1.msra.mxu0 %v193
    %228 = vmatprep.subr.mxu0 0.0
    %229 = vmatpush1.msra.mxu0 %v194
    %230 = vmatprep.subr.mxu0 0.0
    %231 = vmatpush1.msra.mxu0 %v195
    %232 = vmatprep.subr.mxu0 0.0
    %233 = vmatpush1.msra.mxu0 %v196
    %234 = vmatprep.subr.mxu0 0.0
    %235 = vmatpush1.msra.mxu0 %v197
    %236 = vmatprep.subr.mxu0 0.0
    %237 = vmatpush1.msra.mxu0 %v198
    %238 = vmatprep.subr.mxu0 0.0
    %239 = vmatpush1.msra.mxu0 0.0
    %240 = vmatprep.subr.mxu0 0.0
    %241 = vmatpush1.msra.mxu0 0.0
    %242 = vmatprep.subr.mxu0 0.0
    %243 = vmatpush1.msra.mxu0 0.0
    %244 = vmatprep.subr.mxu0 0.0
    %245 = vmatpush1.msra.mxu0 0.0
    %246 = vmatprep.subr.mxu0 0.0
    %247 = vmatpush1.msra.mxu0 0.0
    %248 = vmatprep.subr.mxu0 0.0
    %249 = vmatpush1.msra.mxu0 0.0
    %250 = vmatprep.subr.mxu0 0.0
    %251 = vmatpush1.msra.mxu0 0.0
    %252 = vmatprep.subr.mxu0 0.0
    %253 = vmatpush1.msra.mxu0 0.0
    %254 = vmatprep.subr.mxu0 0.0
    %255 = vmatpush1.msra.mxu0 0.0
    %256 = vmatprep.subr.mxu0 0.0
    %257 = vmatpush1.msra.mxu0 0.0
    %258 = vmatprep.subr.mxu0 0.0
    %259 = vmatpush1.msra.mxu0 0.0
    %260 = vmatprep.subr.mxu0 0.0
    %261 = vmatpush1.msra.mxu0 0.0
    %262 = vmatprep.subr.mxu0 0.0
    %263 = vmatpush1.msra.mxu0 0.0
    %264 = vmatprep.subr.mxu0 0.0
    %265 = vmatpush1.msra.mxu0 0.0
    %266 = vmatprep.subr.mxu0 0.0
    %267 = vmatpush1.msra.mxu0 0.0
    %268 = vmatprep.subr.mxu0 0.0
    %269 = vmatpush1.msra.mxu0 0.0
    %270 = vmatprep.mubr.f32.mxu0 0.0
    %271 = vmatmul.mubr.f32.gmra.mrb[0].mxu0 %v182
    %v272 = vpop.f32.mrb[0].mxu0
    %v273 = vadd.f32 %v204, %v272
    %v274 = vpop.f32.mrb[0].mxu0
    %275 = vdwg.mxu0
    %v276 = vmax.f32 %v273, 0.0
    %s277 = scalar_lea.vmem [#allocation6], 128
    %v278 = vld [vmem:[%s277] sm:$0xff]
    %v279 = vld [vmem:[%s277 + $0x8] sm:$0xff]
    %v280 = vld [vmem:[%s277 + $0x10] sm:$0xff]
    %v281 = vld [vmem:[%s277 + $0x18] sm:$0xff]
    %v282 = vld [vmem:[%s277 + $0x20] sm:$0xff]
    %v283 = vld [vmem:[%s277 + $0x28] sm:$0xff]
    %v284 = vld [vmem:[%s277 + $0x30] sm:$0xff]
    %v285 = vld [vmem:[%s277 + $0x38] sm:$0xff]
    %v286 = vld [vmem:[%s277 + $0x40] sm:$0xff]
    %v287 = vld [vmem:[%s277 + $0x48] sm:$0xff]
    %v288 = vld [vmem:[%s277 + $0x50] sm:$0xff]
    %v289 = vld [vmem:[%s277 + $0x58] sm:$0xff]
    %v290 = vld [vmem:[%s277 + $0x60] sm:$0xff]
    %v291 = vld [vmem:[%s277 + $0x68] sm:$0xff]
    %v292 = vld [vmem:[%s277 + $0x70] sm:$0xff]
    %v293 = vld [vmem:[%s277 + $0x78] sm:$0xff]
    %s294 = scalar_lea.vmem %s4, 1
    %v295 = vld [vmem:[%s294] sm:$0x1]
    %v297 = vlaneseq
    %v298 = vshrl.u32 %v297, 7
    %v299 = vsub.s32 0, %v298
    %v300 = vrot.slane %v295, %v299
    %302 = vmatprep.subr.mxu0 0.0
    %303 = vmatpush1.msra.mxu0 %v278
    %304 = vmatprep.subr.mxu0 0.0
    %305 = vmatpush1.msra.mxu0 %v279
    %306 = vmatprep.subr.mxu0 0.0
    %307 = vmatpush1.msra.mxu0 %v280
    %308 = vmatprep.subr.mxu0 0.0
    %309 = vmatpush1.msra.mxu0 %v281
    %310 = vmatprep.subr.mxu0 0.0
    %311 = vmatpush1.msra.mxu0 %v282
    %312 = vmatprep.subr.mxu0 0.0
    %313 = vmatpush1.msra.mxu0 %v283
    %314 = vmatprep.subr.mxu0 0.0
    %315 = vmatpush1.msra.mxu0 %v284
    %316 = vmatprep.subr.mxu0 0.0
    %317 = vmatpush1.msra.mxu0 %v285
    %318 = vmatprep.subr.mxu0 0.0
    %319 = vmatpush1.msra.mxu0 %v286
    %320 = vmatprep.subr.mxu0 0.0
    %321 = vmatpush1.msra.mxu0 %v287
    %322 = vmatprep.subr.mxu0 0.0
    %323 = vmatpush1.msra.mxu0 %v288
    %324 = vmatprep.subr.mxu0 0.0
    %325 = vmatpush1.msra.mxu0 %v289
    %326 = vmatprep.subr.mxu0 0.0
    %327 = vmatpush1.msra.mxu0 %v290
    %328 = vmatprep.subr.mxu0 0.0
    %329 = vmatpush1.msra.mxu0 %v291
    %330 = vmatprep.subr.mxu0 0.0
    %331 = vmatpush1.msra.mxu0 %v292
    %332 = vmatprep.subr.mxu0 0.0
    %333 = vmatpush1.msra.mxu0 %v293
    %334 = vmatprep.subr.mxu0 0.0
    %335 = vmatpush1.msra.mxu0 0.0
    %336 = vmatprep.subr.mxu0 0.0
    %337 = vmatpush1.msra.mxu0 0.0
    %338 = vmatprep.subr.mxu0 0.0
    %339 = vmatpush1.msra.mxu0 0.0
    %340 = vmatprep.subr.mxu0 0.0
    %341 = vmatpush1.msra.mxu0 0.0
    %342 = vmatprep.subr.mxu0 0.0
    %343 = vmatpush1.msra.mxu0 0.0
    %344 = vmatprep.subr.mxu0 0.0
    %345 = vmatpush1.msra.mxu0 0.0
    %346 = vmatprep.subr.mxu0 0.0
    %347 = vmatpush1.msra.mxu0 0.0
    %348 = vmatprep.subr.mxu0 0.0
    %349 = vmatpush1.msra.mxu0 0.0
    %350 = vmatprep.subr.mxu0 0.0
    %351 = vmatpush1.msra.mxu0 0.0
    %352 = vmatprep.subr.mxu0 0.0
    %353 = vmatpush1.msra.mxu0 0.0
    %354 = vmatprep.subr.mxu0 0.0
    %355 = vmatpush1.msra.mxu0 0.0
    %356 = vmatprep.subr.mxu0 0.0
    %357 = vmatpush1.msra.mxu0 0.0
    %358 = vmatprep.subr.mxu0 0.0
    %359 = vmatpush1.msra.mxu0 0.0
    %360 = vmatprep.subr.mxu0 0.0
    %361 = vmatpush1.msra.mxu0 0.0
    %362 = vmatprep.subr.mxu0 0.0
    %363 = vmatpush1.msra.mxu0 0.0
    %364 = vmatprep.subr.mxu0 0.0
    %365 = vmatpush1.msra.mxu0 0.0
    %366 = vmatprep.mubr.f32.mxu0 0.0
    %367 = vmatmul.mubr.f32.gmra.mrb[0].mxu0 %v276
    %v368 = vpop.f32.mrb[0].mxu0
    %v369 = vadd.f32 %v300, %v368
    %v370 = vpop.f32.mrb[0].mxu0
    %371 = vdwg.mxu0
    %v372 = vmax.f32 %v369, 0.0
    %v373 = vld [vmem:[#allocation7] sm:$0xff]
    %v374 = vld [vmem:[#allocation7 + $0x8] sm:$0xff]
    %v375 = vld [vmem:[#allocation7 + $0x10] sm:$0xff]
    %v376 = vld [vmem:[#allocation7 + $0x18] sm:$0xff]
    %v377 = vld [vmem:[#allocation7 + $0x20] sm:$0xff]
    %v378 = vld [vmem:[#allocation7 + $0x28] sm:$0xff]
    %v379 = vld [vmem:[#allocation7 + $0x30] sm:$0xff]
    %v380 = vld [vmem:[#allocation7 + $0x38] sm:$0xff]
    %v381 = vld [vmem:[#allocation7 + $0x40] sm:$0xff]
    %v382 = vld [vmem:[#allocation7 + $0x48] sm:$0xff]
    %v383 = vld [vmem:[#allocation7 + $0x50] sm:$0xff]
    %v384 = vld [vmem:[#allocation7 + $0x58] sm:$0xff]
    %v385 = vld [vmem:[#allocation7 + $0x60] sm:$0xff]
    %v386 = vld [vmem:[#allocation7 + $0x68] sm:$0xff]
    %v387 = vld [vmem:[#allocation7 + $0x70] sm:$0xff]
    %v388 = vld [vmem:[#allocation7 + $0x78] sm:$0xff]
    %v389 = vld [vmem:[%s6] sm:$0x1]
    %v391 = vlaneseq
    %v392 = vshrl.u32 %v391, 7
    %v393 = vsub.s32 0, %v392
    %v394 = vrot.slane %v389, %v393
    %396 = vmatprep.subr.mxu0 0.0
    %397 = vmatpush1.msra.mxu0 %v373
    %398 = vmatprep.subr.mxu0 0.0
    %399 = vmatpush1.msra.mxu0 %v374
    %400 = vmatprep.subr.mxu0 0.0
    %401 = vmatpush1.msra.mxu0 %v375
    %402 = vmatprep.subr.mxu0 0.0
    %403 = vmatpush1.msra.mxu0 %v376
    %404 = vmatprep.subr.mxu0 0.0
    %405 = vmatpush1.msra.mxu0 %v377
    %406 = vmatprep.subr.mxu0 0.0
    %407 = vmatpush1.msra.mxu0 %v378
    %408 = vmatprep.subr.mxu0 0.0
    %409 = vmatpush1.msra.mxu0 %v379
    %410 = vmatprep.subr.mxu0 0.0
    %411 = vmatpush1.msra.mxu0 %v380
    %412 = vmatprep.subr.mxu0 0.0
    %413 = vmatpush1.msra.mxu0 %v381
    %414 = vmatprep.subr.mxu0 0.0
    %415 = vmatpush1.msra.mxu0 %v382
    %416 = vmatprep.subr.mxu0 0.0
    %417 = vmatpush1.msra.mxu0 %v383
    %418 = vmatprep.subr.mxu0 0.0
    %419 = vmatpush1.msra.mxu0 %v384
    %420 = vmatprep.subr.mxu0 0.0
    %421 = vmatpush1.msra.mxu0 %v385
    %422 = vmatprep.subr.mxu0 0.0
    %423 = vmatpush1.msra.mxu0 %v386
    %424 = vmatprep.subr.mxu0 0.0
    %425 = vmatpush1.msra.mxu0 %v387
    %426 = vmatprep.subr.mxu0 0.0
    %427 = vmatpush1.msra.mxu0 %v388
    %428 = vmatprep.subr.mxu0 0.0
    %429 = vmatpush1.msra.mxu0 0.0
    %430 = vmatprep.subr.mxu0 0.0
    %431 = vmatpush1.msra.mxu0 0.0
    %432 = vmatprep.subr.mxu0 0.0
    %433 = vmatpush1.msra.mxu0 0.0
    %434 = vmatprep.subr.mxu0 0.0
    %435 = vmatpush1.msra.mxu0 0.0
    %436 = vmatprep.subr.mxu0 0.0
    %437 = vmatpush1.msra.mxu0 0.0
    %438 = vmatprep.subr.mxu0 0.0
    %439 = vmatpush1.msra.mxu0 0.0
    %440 = vmatprep.subr.mxu0 0.0
    %441 = vmatpush1.msra.mxu0 0.0
    %442 = vmatprep.subr.mxu0 0.0
    %443 = vmatpush1.msra.mxu0 0.0
    %444 = vmatprep.subr.mxu0 0.0
    %445 = vmatpush1.msra.mxu0 0.0
    %446 = vmatprep.subr.mxu0 0.0
    %447 = vmatpush1.msra.mxu0 0.0
    %448 = vmatprep.subr.mxu0 0.0
    %449 = vmatpush1.msra.mxu0 0.0
    %450 = vmatprep.subr.mxu0 0.0
    %451 = vmatpush1.msra.mxu0 0.0
    %452 = vmatprep.subr.mxu0 0.0
    %453 = vmatpush1.msra.mxu0 0.0
    %454 = vmatprep.subr.mxu0 0.0
    %455 = vmatpush1.msra.mxu0 0.0
    %456 = vmatprep.subr.mxu0 0.0
    %457 = vmatpush1.msra.mxu0 0.0
    %458 = vmatprep.subr.mxu0 0.0
    %459 = vmatpush1.msra.mxu0 0.0
    %460 = vmatprep.mubr.f32.mxu0 0.0
    %461 = vmatmul.mubr.f32.gmra.mrb[0].mxu0 %v372
    %v462 = vpop.f32.mrb[0].mxu0
    %v463 = vadd.f32 %v394, %v462
    %v464 = vpop.f32.mrb[0].mxu0
    %465 = vdwg.mxu0
    %v466 = vmax.f32 %v463, 0.0
    %v467 = vld [vmem:[#allocation9] sm:$0xff]
    %v468 = vld [vmem:[#allocation9 + $0x8] sm:$0xff]
    %v469 = vld [vmem:[#allocation9 + $0x10] sm:$0xff]
    %v470 = vld [vmem:[#allocation9 + $0x18] sm:$0xff]
    %v471 = vld [vmem:[#allocation9 + $0x20] sm:$0xff]
    %v472 = vld [vmem:[#allocation9 + $0x28] sm:$0xff]
    %v473 = vld [vmem:[#allocation9 + $0x30] sm:$0xff]
    %v474 = vld [vmem:[#allocation9 + $0x38] sm:$0xff]
    %v475 = vld [vmem:[#allocation9 + $0x40] sm:$0xff]
    %v476 = vld [vmem:[#allocation9 + $0x48] sm:$0xff]
    %v477 = vld [vmem:[#allocation9 + $0x50] sm:$0xff]
    %v478 = vld [vmem:[#allocation9 + $0x58] sm:$0xff]
    %v479 = vld [vmem:[#allocation9 + $0x60] sm:$0xff]
    %v480 = vld [vmem:[#allocation9 + $0x68] sm:$0xff]
    %v481 = vld [vmem:[#allocation9 + $0x70] sm:$0xff]
    %v482 = vld [vmem:[#allocation9 + $0x78] sm:$0xff]
    %v483 = vld [vmem:[#allocation9 + $0x80] sm:$0xff]
    %v484 = vld [vmem:[#allocation9 + $0x88] sm:$0xff]
    %v485 = vld [vmem:[#allocation9 + $0x90] sm:$0xff]
    %v486 = vld [vmem:[#allocation9 + $0x98] sm:$0xff]
    %v487 = vld [vmem:[#allocation9 + $0xa0] sm:$0xff]
    %v488 = vld [vmem:[#allocation9 + $0xa8] sm:$0xff]
    %v489 = vld [vmem:[#allocation9 + $0xb0] sm:$0xff]
    %v490 = vld [vmem:[#allocation9 + $0xb8] sm:$0xff]
    %v491 = vld [vmem:[#allocation9 + $0xc0] sm:$0xff]
    %v492 = vld [vmem:[#allocation9 + $0xc8] sm:$0xff]
    %v493 = vld [vmem:[#allocation9 + $0xd0] sm:$0xff]
    %v494 = vld [vmem:[#allocation9 + $0xd8] sm:$0xff]
    %v495 = vld [vmem:[#allocation9 + $0xe0] sm:$0xff]
    %v496 = vld [vmem:[#allocation9 + $0xe8] sm:$0xff]
    %v497 = vld [vmem:[#allocation9 + $0xf0] sm:$0xff]
    %v498 = vld [vmem:[#allocation9 + $0xf8] sm:$0xff]
    %v499 = vld [vmem:[%s8] sm:$0x3]
    %v501 = vlaneseq
    %v502 = vshrl.u32 %v501, 7
    %v503 = vsub.s32 0, %v502
    %v504 = vrot.slane %v499, %v503
    %v505 = vlaneseq
    %v506 = vshrl.u32 %v505, 7
    %v507 = vsub.s32 1, %v506
    %v508 = vrot.slane %v499, %v507
    %511 = vmatprep.subr.mxu0 %v468
    %512 = vmatpush1.msra.mxu0 %v467
    %513 = vmatprep.subr.mxu0 %v470
    %514 = vmatpush1.msra.mxu0 %v469
    %515 = vmatprep.subr.mxu0 %v472
    %516 = vmatpush1.msra.mxu0 %v471
    %517 = vmatprep.subr.mxu0 %v474
    %518 = vmatpush1.msra.mxu0 %v473
    %519 = vmatprep.subr.mxu0 %v476
    %520 = vmatpush1.msra.mxu0 %v475
    %521 = vmatprep.subr.mxu0 %v478
    %522 = vmatpush1.msra.mxu0 %v477
    %523 = vmatprep.subr.mxu0 %v480
    %524 = vmatpush1.msra.mxu0 %v479
    %525 = vmatprep.subr.mxu0 %v482
    %526 = vmatpush1.msra.mxu0 %v481
    %527 = vmatprep.subr.mxu0 %v484
    %528 = vmatpush1.msra.mxu0 %v483
    %529 = vmatprep.subr.mxu0 %v486
    %530 = vmatpush1.msra.mxu0 %v485
    %531 = vmatprep.subr.mxu0 %v488
    %532 = vmatpush1.msra.mxu0 %v487
    %533 = vmatprep.subr.mxu0 %v490
    %534 = vmatpush1.msra.mxu0 %v489
    %535 = vmatprep.subr.mxu0 %v492
    %536 = vmatpush1.msra.mxu0 %v491
    %537 = vmatprep.subr.mxu0 %v494
    %538 = vmatpush1.msra.mxu0 %v493
    %539 = vmatprep.subr.mxu0 %v496
    %540 = vmatpush1.msra.mxu0 %v495
    %541 = vmatprep.subr.mxu0 %v498
    %542 = vmatpush1.msra.mxu0 %v497
    %543 = vmatprep.subr.mxu0 0.0
    %544 = vmatpush1.msra.mxu0 0.0
    %545 = vmatprep.subr.mxu0 0.0
    %546 = vmatpush1.msra.mxu0 0.0
    %547 = vmatprep.subr.mxu0 0.0
    %548 = vmatpush1.msra.mxu0 0.0
    %549 = vmatprep.subr.mxu0 0.0
    %550 = vmatpush1.msra.mxu0 0.0
    %551 = vmatprep.subr.mxu0 0.0
    %552 = vmatpush1.msra.mxu0 0.0
    %553 = vmatprep.subr.mxu0 0.0
    %554 = vmatpush1.msra.mxu0 0.0
    %555 = vmatprep.subr.mxu0 0.0
    %556 = vmatpush1.msra.mxu0 0.0
    %557 = vmatprep.subr.mxu0 0.0
    %558 = vmatpush1.msra.mxu0 0.0
    %559 = vmatprep.subr.mxu0 0.0
    %560 = vmatpush1.msra.mxu0 0.0
    %561 = vmatprep.subr.mxu0 0.0
    %562 = vmatpush1.msra.mxu0 0.0
    %563 = vmatprep.subr.mxu0 0.0
    %564 = vmatpush1.msra.mxu0 0.0
    %565 = vmatprep.subr.mxu0 0.0
    %566 = vmatpush1.msra.mxu0 0.0
    %567 = vmatprep.subr.mxu0 0.0
    %568 = vmatpush1.msra.mxu0 0.0
    %569 = vmatprep.subr.mxu0 0.0
    %570 = vmatpush1.msra.mxu0 0.0
    %571 = vmatprep.subr.mxu0 0.0
    %572 = vmatpush1.msra.mxu0 0.0
    %573 = vmatprep.subr.mxu0 0.0
    %574 = vmatpush1.msra.mxu0 0.0
    %575 = vmatprep.mubr.f32.mxu0 0.0
    %576 = vmatmul.mubr.f32.gmra.mrb[0].mxu0 %v466
    %v577 = vpop.f32.mrb[0].mxu0
    %v578 = vadd.f32 %v504, %v577
    %v579 = vpop.f32.mrb[0].mxu0
    %v580 = vadd.f32 %v508, %v579
    %581 = vdwg.mxu0
    %582 = vst [vmem:[%s9] sm:$0xff] %v578
    %583 = vst [vmem:[%s9 + $0x8] sm:$0xff] %v580
    // Predicated region
    $region58: #{actor_forward.1} parent=1 // pred_check
      _
    $region59: #{actor_forward.1} parent=1 // pred_check_branch
      %585 = sbr.rel (0) target = $region61
    $region60: #{actor_forward.1} parent=1 // pred_region
      _
    $region61: #{actor_forward.1} parent=1 // pred_fallthru
      _
    // Predicated region
    $region62: #{actor_forward.1} parent=1 // pred_check
      _
    $region63: #{actor_forward.1} parent=1 // pred_check_branch
      %587 = sbr.rel (0) target = $region65
    $region64: #{actor_forward.1} parent=1 // pred_region
      _
    $region65: #{actor_forward.1} parent=1 // pred_fallthru
      _
    %588 = vsyncpa [#allocation3], 1
    %589 = vsyncpa [#allocation5], 1
    %590 = vsyncpa [#allocation8], 1

</llo_original>
